<compile_context>
chip_gen: v6e
topology: v6e:2x2x1
jax: 0.10.0
libtpu: 0.0.40
codegen_flags: <defaults>
</compile_context>

<pallas_src>
from functools import partial

import jax
import jax.numpy as jnp
from jax import lax
from jax.experimental import pallas as pl
from jax.experimental.pallas import tpu as pltpu


def _layer_norm_kernel(x_ref, g_ref, o_ref, *, eps):
    # x_ref: (1, C, TH, W)   g_ref: (1, C, 1, W)   o_ref: (1, C, TH, W)
    x = x_ref[...].astype(jnp.float32)
    mean = jnp.mean(x, axis=1, keepdims=True)                    # (1, 1, TH, W)
    centered = x - mean
    var = jnp.mean(centered * centered, axis=1, keepdims=True)   # biased variance
    inv = lax.rsqrt(var + eps)                                   # EUP rsqrt
    g = g_ref[...].astype(jnp.float32)                           # (1, C, 1, W)
    o_ref[...] = (centered * inv * g).astype(o_ref.dtype)        # single lane-dense store


def layer_norm(x, g, *, block_h=None):
    """x: (B, C, H, W), g: (C,) (or broadcastable) -> (B, C, H, W)."""
    b, c, h, w = x.shape
    eps = 1e-5 if x.dtype == jnp.float32 else 1e-3

    # Present the gain as (1, C, 1, W): tiny HBM cost, trivially legal layout,
    # and the in-kernel broadcast is a plain sublane broadcast.
    g4 = jnp.broadcast_to(
        jnp.asarray(g, dtype=x.dtype).reshape(1, c, 1, 1), (1, c, 1, w)
    )

    # H tile: full H by default; if tiling, it must divide H and be a
    # multiple of 8 (sublane dim).  Cap this for v7x (64 MiB VMEM) at scale.
    if block_h is None or block_h >= h or (h % block_h != 0) or (block_h % 8 != 0):
        block_h = h
    n_h = h // block_h

    kernel = partial(_layer_norm_kernel, eps=eps)
    return pl.pallas_call(
        kernel,
        out_shape=jax.ShapeDtypeStruct((b, c, h, w), x.dtype),
        grid=(b, n_h),
        in_specs=[
            pl.BlockSpec((1, c, block_h, w), lambda bi, hi: (bi, 0, hi, 0)),
            pl.BlockSpec((1, c, 1, w), lambda bi, hi: (0, 0, 0, 0)),
        ],
        out_specs=pl.BlockSpec((1, c, block_h, w), lambda bi, hi: (bi, 0, hi, 0)),
        compiler_params=pltpu.CompilerParams(
            dimension_semantics=("parallel", "parallel")
        ),
    )(x, g4)


def _reference(x, g):
    eps = 1e-5 if x.dtype == jnp.float32 else 1e-3
    mean = jnp.mean(x, axis=1, keepdims=True)
    var = jnp.mean((x - mean) ** 2, axis=1, keepdims=True)
    return (x - mean) * lax.rsqrt(var + eps) * g.reshape(1, -1, 1, 1)


if __name__ == "__main__":
    key = jax.random.PRNGKey(0)
    k_x, k_g = jax.random.split(key)

    b, c, h, w = 2, 4, 16, 16
    x = jax.random.normal(k_x, (b, c, h, w), dtype=jnp.float32)
    # Module initialises g to ones; use a deterministic non-trivial gain to
    # exercise the per-channel scale path.
    g = 1.0 + 0.1 * jax.random.normal(k_g, (c,), dtype=jnp.float32)

    out = layer_norm(x, g)
    out = jax.block_until_ready(out)

    ref = _reference(x, g)
    assert out.shape == x.shape, out.shape
    assert jnp.allclose(out, ref, atol=1e-5, rtol=1e-4), float(
        jnp.max(jnp.abs(out - ref))
    )

    print("KERNEL_OK")
</pallas_src>

<mosaic_0001>
module attributes {stable_mosaic.version = 11 : i64} {
  func.func @_layer_norm_kernel(%arg0: i32, %arg1: i32, %arg2: memref<1x4x16x16xf32, #tpu.memory_space<vmem>>, %arg3: memref<1x4x1x16xf32, #tpu.memory_space<vmem>>, %arg4: memref<1x4x16x16xf32, #tpu.memory_space<vmem>>) attributes {dimension_semantics = [#tpu.dimension_semantics<parallel>, #tpu.dimension_semantics<parallel>], iteration_bounds = array<i64: 2, 1>, scalar_prefetch = 0 : i64, scratch_operands = 0 : i64, tpu.core_type = #tpu.core_type<tc>, window_params = [{transform_indices = @transform_0, window_bounds = array<i64: 1, 4, 16, 16>}, {pipeline_mode = #tpu.pipeline_mode<synchronous>, transform_indices = @transform_1, window_bounds = array<i64: 1, 4, 1, 16>}, {transform_indices = @transform_2, window_bounds = array<i64: 1, 4, 16, 16>}]} {
    %c0 = arith.constant 0 : index
    %c0_0 = arith.constant 0 : index
    %c0_1 = arith.constant 0 : index
    %c0_2 = arith.constant 0 : index
    %0 = vector.load %arg2[%c0, %c0_0, %c0_1, %c0_2] : memref<1x4x16x16xf32, #tpu.memory_space<vmem>>, vector<1x4x16x16xf32>
    %cst = arith.constant dense<0.000000e+00> : vector<1x16x16xf32>
    %1 = vector.multi_reduction <add>, %0, %cst [1] : vector<1x4x16x16xf32> to vector<1x16x16xf32>
    %2 = vector.shape_cast %1 : vector<1x16x16xf32> to vector<1x1x16x16xf32>
    %cst_3 = arith.constant 4.000000e+00 : f32
    %3 = vector.broadcast %cst_3 : f32 to vector<1x1x16x16xf32>
    %4 = arith.divf %2, %3 : vector<1x1x16x16xf32>
    %5 = vector.broadcast %4 : vector<1x1x16x16xf32> to vector<1x4x16x16xf32>
    %6 = arith.subf %0, %5 : vector<1x4x16x16xf32>
    %7 = arith.mulf %6, %6 : vector<1x4x16x16xf32>
    %cst_4 = arith.constant dense<0.000000e+00> : vector<1x16x16xf32>
    %8 = vector.multi_reduction <add>, %7, %cst_4 [1] : vector<1x4x16x16xf32> to vector<1x16x16xf32>
    %9 = vector.shape_cast %8 : vector<1x16x16xf32> to vector<1x1x16x16xf32>
    %cst_5 = arith.constant 4.000000e+00 : f32
    %10 = vector.broadcast %cst_5 : f32 to vector<1x1x16x16xf32>
    %11 = arith.divf %9, %10 : vector<1x1x16x16xf32>
    %cst_6 = arith.constant 9.99999974E-6 : f32
    %12 = vector.broadcast %cst_6 : f32 to vector<1x1x16x16xf32>
    %13 = arith.addf %11, %12 : vector<1x1x16x16xf32>
    %14 = math.rsqrt %13 : vector<1x1x16x16xf32>
    %c0_7 = arith.constant 0 : index
    %c0_8 = arith.constant 0 : index
    %c0_9 = arith.constant 0 : index
    %c0_10 = arith.constant 0 : index
    %15 = vector.load %arg3[%c0_7, %c0_8, %c0_9, %c0_10] : memref<1x4x1x16xf32, #tpu.memory_space<vmem>>, vector<1x4x1x16xf32>
    %16 = vector.broadcast %14 : vector<1x1x16x16xf32> to vector<1x4x16x16xf32>
    %17 = arith.mulf %6, %16 : vector<1x4x16x16xf32>
    %18 = vector.broadcast %15 : vector<1x4x1x16xf32> to vector<1x4x16x16xf32>
    %19 = arith.mulf %17, %18 : vector<1x4x16x16xf32>
    %c0_11 = arith.constant 0 : index
    %c0_12 = arith.constant 0 : index
    %c0_13 = arith.constant 0 : index
    %c0_14 = arith.constant 0 : index
    %20 = vector.load %arg4[%c0_11, %c0_12, %c0_13, %c0_14] : memref<1x4x16x16xf32, #tpu.memory_space<vmem>>, vector<1x4x16x16xf32>
    tpu.vector_store %arg4[%c0_11, %c0_12, %c0_13, %c0_14], %19 {strides = array<i32>} : memref<1x4x16x16xf32, #tpu.memory_space<vmem>>, vector<1x4x16x16xf32>,
    return
  }
  func.func @transform_0(%arg0: i32, %arg1: i32) -> (i32, i32, i32, i32) {
    %c0_i32 = arith.constant 0 : i32
    %c0_i32_0 = arith.constant 0 : i32
    %c0_i32_1 = arith.constant 0 : i32
    return %arg0, %c0_i32, %arg1, %c0_i32_0 : i32, i32, i32, i32
  }
  func.func @transform_1(%arg0: i32, %arg1: i32) -> (i32, i32, i32, i32) {
    %c0_i32 = arith.constant 0 : i32
    %c0_i32_0 = arith.constant 0 : i32
    %c0_i32_1 = arith.constant 0 : i32
    %c0_i32_2 = arith.constant 0 : i32
    %c0_i32_3 = arith.constant 0 : i32
    return %c0_i32, %c0_i32_0, %c0_i32_1, %c0_i32_2 : i32, i32, i32, i32
  }
  func.func @transform_2(%arg0: i32, %arg1: i32) -> (i32, i32, i32, i32) {
    %c0_i32 = arith.constant 0 : i32
    %c0_i32_0 = arith.constant 0 : i32
    %c0_i32_1 = arith.constant 0 : i32
    return %arg0, %c0_i32, %arg1, %c0_i32_0 : i32, i32, i32, i32
  }
}

</mosaic_0001>

<llo_original>
// kernel: tpu_custom_call.1
$region0: #{tpu_custom_call.1}
  #allocation0 [shape = 'u32[]', space=smem, size = 0x4, offset = 0x4, fixed_abs, tag = 'smem constant byte address 0x4 - core index']
  #allocation1 [shape = 'u32[144,128]{1,0:T(1,128)}', space=vmem, size = 0x12000, scoped, tag = 'internal scratch']
  %s0 = inlined_call_operand.hbm [shape: f32[2,4,16,16], index: 0, kind: input, shape index: {}]
  %s1 = inlined_call_operand.hbm [shape: f32[1,4,1,16], index: 1, kind: input, shape index: {}]
  %s2 = inlined_call_operand.hbm [shape: f32[2,4,16,16], index: 2, kind: output, shape index: {}]
  %s3 = sld [smem:[#allocation0]]
  $region49: #{tpu_custom_call.1} parent=0
    _
  %s5 = ssub.s32 1, %s3
  %s6 = scalar_select 0, %s5, %s3
  $region1: #{tpu_custom_call.1} parent=0
    #allocation2 [shape = 'u8[65536]{0}', space=vmem, size = 0x10000, scoped, tag = 'input window, operand 0']
    #allocation3 [shape = 's32[2]{0}', space=sflag, size = 0x8, scoped, tag = 'scoped memory for tpu_custom_call.1']
    #allocation4 [shape = 's32[2]{0}', space=sflag, size = 0x8, scoped, tag = 'scoped memory for tpu_custom_call.1']
    #allocation5 [shape = 'u8[2048]{0}', space=vmem, size = 0x800, scoped, tag = 'input window, operand 1, single buffered']
    #allocation6 [shape = 's32[1]{0}', space=sflag, size = 0x4, scoped, tag = 'scoped memory for tpu_custom_call.1']
    #allocation7 [shape = 'u8[65536]{0}', space=vmem, size = 0x10000, scoped, tag = 'output window, operand 0']
    %7 = vsyncpa [#allocation3], 0
    %s8 = scalar_lea.sflag [#allocation3], 1
    %9 = vsyncpa %s8, 0
    %10 = vsyncpa [#allocation6], 0
    %11 = vsyncpa [#allocation4], 0
    %s12 = scalar_lea.sflag [#allocation4], 1
    %13 = vsyncpa %s12, 0
    loop: start=0, step=1, limit=4
    $region2: #{tpu_custom_call.1} parent=1 // loop_pre_header
      _
    $region3: #{tpu_custom_call.1} parent=1 // loop_header
      %s15 = sphi 0, %s19
      %p16 = scmp.ge.s32.totalorder %s15, 4
      %s22 = sphi 0, %s34
      %s23 = sphi 0, %s30
      %s24 = sphi 0, %s22
      %s25 = sphi 0, %s23
      %s26 = sphi 0, %s24
      %s27 = sphi 0, %s25
      %s39 = sphi 0, %s41
      %s42 = sphi 0, %s39
      %s43 = sphi 0, %s42
      %s59 = sphi 0, %s43
      %s63 = sphi 0, %s63
      %s65 = sphi 0, %s63
      %s66 = sphi 0, %s65
      %s80 = sphi 0, %s66
      %s88 = sphi 0, %s90
      %s91 = sphi 0, %s88
      %s92 = sphi 0, %s91
      %s108 = sphi 0, %s92
    $region4: #{tpu_custom_call.1} parent=1 // loop_header_branch
      %18 = sbr.rel (%p16) target = $region8
    $region5: #{tpu_custom_call.1} parent=1 // loop_body
      %s20 = ssub.s32 %s15, 1
      %s21 = ssub.s32 %s15, 2
      %s28 = sadd.s32 1, %s23
      %p29 = scmp.ge.s32.totalorder %s28, 1
      %s30 = scalar_select %p29, 0, %s28
      %s31 = sadd.s32 1, %s22
      %s32 = scalar_select %p29, %s31, %s22
      %p33 = scmp.ge.s32.totalorder %s32, 2
      %s34 = scalar_select %p33, 0, %s32
      %s35 = ssub.s32 %s22, %s34
      %s36 = ssub.s32 %s23, %s30
      %s37 = sor.u32 %s35, %s36
      %p38 = scmp.eq.s32.totalorder %s37, 0
      %s40 = sadd.s32 %s39, 1
      %s41 = scalar_select %p38, %s39, %s40
      %p44 = pneg %p38
      %p45 = scmp.eq.s32.totalorder %s15, 1
      %p46 = por %p44, %p45
      %p47 = scmp.ne.s32.totalorder %s39, %s42
      %p48 = scmp.eq.s32.totalorder %s15, 0
      %p49 = por %p47, %p48
      %p50 = scmp.ne.s32.totalorder %s39, %s42
      %p51 = scmp.eq.s32.totalorder %s20, 1
      %p52 = por %p50, %p51
      %p53 = scmp.ne.s32.totalorder %s42, %s43
      %p54 = scmp.eq.s32.totalorder %s20, 0
      %p55 = por %p53, %p54
      %p56 = scmp.ne.s32.totalorder %s42, %s43
      %p57 = scmp.eq.s32.totalorder %s21, 1
      %p58 = por %p56, %p57
      %p60 = scmp.ne.s32.totalorder %s43, %s59
      %p61 = scmp.eq.s32.totalorder %s21, 0
      %p62 = por %p60, %p61
      %s64 = sadd.s32 %s63, 1
      %p67 = scmp.eq.s32.totalorder %s15, 1
      %p68 = scmp.ne.s32.totalorder %s63, %s65
      %p69 = scmp.eq.s32.totalorder %s15, 0
      %p70 = por %p68, %p69
      %p71 = scmp.ne.s32.totalorder %s63, %s65
      %p72 = scmp.eq.s32.totalorder %s20, 1
      %p73 = por %p71, %p72
      %p74 = scmp.ne.s32.totalorder %s65, %s66
      %p75 = scmp.eq.s32.totalorder %s20, 0
      %p76 = por %p74, %p75
      %p77 = scmp.ne.s32.totalorder %s65, %s66
      %p78 = scmp.eq.s32.totalorder %s21, 1
      %p79 = por %p77, %p78
      %p81 = scmp.ne.s32.totalorder %s66, %s80
      %p82 = scmp.eq.s32.totalorder %s21, 0
      %p83 = por %p81, %p82
      %s84 = ssub.s32 %s22, %s34
      %s85 = ssub.s32 %s23, %s30
      %s86 = sor.u32 %s84, %s85
      %p87 = scmp.eq.s32.totalorder %s86, 0
      %s89 = sadd.s32 %s88, 1
      %s90 = scalar_select %p87, %s88, %s89
      %p93 = pneg %p87
      %p94 = scmp.eq.s32.totalorder %s15, 1
      %p95 = por %p93, %p94
      %p96 = scmp.ne.s32.totalorder %s88, %s91
      %p97 = scmp.eq.s32.totalorder %s15, 0
      %p98 = por %p96, %p97
      %p99 = scmp.ne.s32.totalorder %s88, %s91
      %p100 = scmp.eq.s32.totalorder %s20, 1
      %p101 = por %p99, %p100
      %p102 = scmp.ne.s32.totalorder %s91, %s92
      %p103 = scmp.eq.s32.totalorder %s20, 0
      %p104 = por %p102, %p103
      %p105 = scmp.ne.s32.totalorder %s91, %s92
      %p106 = scmp.eq.s32.totalorder %s21, 1
      %p107 = por %p105, %p106
      %p109 = scmp.ne.s32.totalorder %s92, %s108
      %p110 = scmp.eq.s32.totalorder %s21, 0
      %p111 = por %p109, %p110
      %p112 = scmp.le.s32.totalorder 1, %s15
      %p113 = scmp.lt.s32.totalorder %s15, 3
      %p114 = pnand %p112, %p113
      %p115 = pneg %p114
      // Predicated region
      $region9: #{tpu_custom_call.1} parent=5 // pred_check
        _
      $region10: #{tpu_custom_call.1} parent=5 // pred_check_branch
        %117 = sbr.rel (%p114) target = $region12
      $region11: #{tpu_custom_call.1} parent=5 // pred_region
        %s118 = ssub.s32 %s15, 1
        // Predicated region
        $region13: #{tpu_custom_call.1} parent=11 // pred_check
          %p119 = pneg %p76
        $region14: #{tpu_custom_call.1} parent=11 // pred_check_branch
          %121 = sbr.rel (%p119) target = $region16
        $region15: #{tpu_custom_call.1} parent=11 // pred_region
          %s123 = ssub.s32 64, 64
          %124 = vsyncadd [#allocation6], %s123
          %s125 = sshll.u32 [#allocation5], 4
          %s126 = int_to_ptr.vmem [resolvable:$true] %s125
          %131 = dma.hbm_to_vmem [thread:$0]  %s1, 64, %s126, [#allocation6], 16, 16, 1
        $region16: #{tpu_custom_call.1} parent=11 // pred_fallthru
          _
      $region12: #{tpu_custom_call.1} parent=5 // pred_fallthru
        _
      %p132 = scmp.lt.s32.totalorder %s15, 2
      // Predicated region
      $region17: #{tpu_custom_call.1} parent=5 // pred_check
        %p133 = pneg %p132
      $region18: #{tpu_custom_call.1} parent=5 // pred_check_branch
        %135 = sbr.rel (%p133) target = $region20
      $region19: #{tpu_custom_call.1} parent=5 // pred_region
        // Predicated region
        $region21: #{tpu_custom_call.1} parent=19 // pred_check
          %p136 = pneg %p49
        $region22: #{tpu_custom_call.1} parent=19 // pred_check_branch
          %138 = sbr.rel (%p136) target = $region24
        $region23: #{tpu_custom_call.1} parent=19 // pred_region
          %s139 = sand.u32 %s39, 1
          %s140 = scalar_lea.sflag [#allocation3], %s139
          %s141 = sand.u32 %s39, 1
          %s142 = smul.addr %s141, 64
          %s143 = scalar_lea.vmem [#allocation2], %s142
          %s144 = smul.u32 2, %s23
          %s146 = ssub.s32 1024, 1024
          %147 = vsyncadd %s140, %s146
          %s148 = smul.addr %s22, 8
          %s149 = sadd.s32 %s144, %s148
          %s150 = smul.addr %s149, 128
          %s151 = scalar_lea.hbm %s0, %s150
          %s152 = sshll.u32 %s143, 4
          %s153 = int_to_ptr.vmem [resolvable:$true] %s152
          %158 = dma.hbm_to_vmem [thread:$0]  %s151, 1024, %s153, %s140, 128, 128, 8
        $region24: #{tpu_custom_call.1} parent=19 // pred_fallthru
          _
      $region20: #{tpu_custom_call.1} parent=5 // pred_fallthru
        _
      %p159 = scmp.le.s32.totalorder 1, %s15
      %p160 = scmp.lt.s32.totalorder %s15, 3
      %p161 = pnand %p159, %p160
      %p162 = pneg %p161
      // Predicated region
      $region25: #{tpu_custom_call.1} parent=5 // pred_check
        _
      $region26: #{tpu_custom_call.1} parent=5 // pred_check_branch
        %164 = sbr.rel (%p161) target = $region28
      $region27: #{tpu_custom_call.1} parent=5 // pred_region
        %s165 = ssub.s32 %s15, 1
        %s166 = sand.u32 %s42, 1
        %s167 = scalar_lea.sflag [#allocation3], %s166
        %s168 = sand.u32 %s42, 1
        %s169 = smul.addr %s168, 64
        %s170 = scalar_lea.vmem [#allocation2], %s169
        // Predicated region
        $region29: #{tpu_custom_call.1} parent=27 // pred_check
          %p171 = pneg %p55
        $region30: #{tpu_custom_call.1} parent=27 // pred_check_branch
          %173 = sbr.rel (%p171) target = $region32
        $region31: #{tpu_custom_call.1} parent=27 // pred_region
          %174 = dma.done %s167, 1024
        $region32: #{tpu_custom_call.1} parent=27 // pred_fallthru
          _
        // Predicated region
        $region33: #{tpu_custom_call.1} parent=27 // pred_check
          %p175 = pneg %p76
        $region34: #{tpu_custom_call.1} parent=27 // pred_check_branch
          %177 = sbr.rel (%p175) target = $region36
        $region35: #{tpu_custom_call.1} parent=27 // pred_region
          %178 = dma.done [#allocation6], 64
        $region36: #{tpu_custom_call.1} parent=27 // pred_fallthru
          _
        %s179 = sand.u32 %s42, 1
        %s180 = scalar_lea.sflag [#allocation3], %s179
        %s181 = sand.u32 %s42, 1
        %s182 = smul.addr %s181, 64
        %s183 = scalar_lea.vmem [#allocation2], %s182
        %p184 = pneg %p55
        %p185 = pneg %p52
        %p186 = pneg %p76
        %p187 = pneg %p73
        %p188 = pneg %p104
        %p189 = pneg %p101
        %s190 = sand.u32 %s91, 1
        %s191 = scalar_lea.sflag [#allocation4], %s190
        %s192 = sand.u32 %s91, 1
        %s193 = smul.addr %s192, 64
        %s194 = scalar_lea.vmem [#allocation7], %s193
        %s195 = smul.u32 2, %s25
        %s196 = smul.u32 2, %s25
        %v197 = vld [vmem:[%s170] sm:$0xff]
        %v198 = vld [vmem:[%s170 + $0x8] sm:$0xff]
        %v199 = vld [vmem:[%s170 + $0x10] sm:$0xff]
        %v200 = vld [vmem:[%s170 + $0x18] sm:$0xff]
        %v201 = vld [vmem:[%s170 + $0x20] sm:$0xff]
        %v202 = vld [vmem:[%s170 + $0x28] sm:$0xff]
        %v203 = vld [vmem:[%s170 + $0x30] sm:$0xff]
        %v204 = vld [vmem:[%s170 + $0x38] sm:$0xff]
        %vm205 = vcmask 130048
        %v206 = vsel %vm205, %v197, 0.0
        %v207 = vsel %vm205, %v199, 0.0
        %v208 = vadd.f32 %v206, %v207
        %v209 = vsel %vm205, %v201, 0.0
        %v210 = vadd.f32 %v208, %v209
        %v211 = vsel %vm205, %v203, 0.0
        %v212 = vadd.f32 %v210, %v211
        %v213 = vsel %vm205, %v198, 0.0
        %v214 = vsel %vm205, %v200, 0.0
        %v215 = vadd.f32 %v213, %v214
        %v216 = vsel %vm205, %v202, 0.0
        %v217 = vadd.f32 %v215, %v216
        %v218 = vsel %vm205, %v204, 0.0
        %v219 = vadd.f32 %v217, %v218
        %v220 = vrcp.pop 4.0
        %v221 = vmul.f32 %v212, %v220
        %v222 = vmul.f32 %v219, %v220
        %v223 = vsub.f32 %v197, %v221
        %v224 = vsub.f32 %v198, %v222
        %v225 = vsub.f32 %v199, %v221
        %v226 = vsub.f32 %v200, %v222
        %v227 = vsub.f32 %v201, %v221
        %v228 = vsub.f32 %v202, %v222
        %v229 = vsub.f32 %v203, %v221
        %v230 = vsub.f32 %v204, %v222
        %v231 = vmul.f32 %v223, %v223
        %v232 = vmul.f32 %v224, %v224
        %v233 = vmul.f32 %v225, %v225
        %v234 = vmul.f32 %v226, %v226
        %v235 = vmul.f32 %v227, %v227
        %v236 = vmul.f32 %v228, %v228
        %v237 = vmul.f32 %v229, %v229
        %v238 = vmul.f32 %v230, %v230
        %v239 = vsel %vm205, %v231, 0.0
        %v240 = vsel %vm205, %v233, 0.0
        %v241 = vadd.f32 %v239, %v240
        %v242 = vsel %vm205, %v235, 0.0
        %v243 = vadd.f32 %v241, %v242
        %v244 = vsel %vm205, %v237, 0.0
        %v245 = vadd.f32 %v243, %v244
        %v246 = vsel %vm205, %v232, 0.0
        %v247 = vsel %vm205, %v234, 0.0
        %v248 = vadd.f32 %v246, %v247
        %v249 = vsel %vm205, %v236, 0.0
        %v250 = vadd.f32 %v248, %v249
        %v251 = vsel %vm205, %v238, 0.0
        %v252 = vadd.f32 %v250, %v251
        %v253 = vmul.f32 %v245, %v220
        %v254 = vmul.f32 %v252, %v220
        %v255 = vadd.f32 %v253, 1e-05
        %v256 = vadd.f32 %v254, 1e-05
        %v257 = vrsqrt.pop %v255
        %v258 = vrsqrt.pop %v256
        %v259 = vld [vmem:[#allocation5] sm:$0x1]
        %v260 = vld [vmem:[#allocation5 + $0x1] sm:$0x1]
        %v261 = vld [vmem:[#allocation5 + $0x2] sm:$0x1]
        %v262 = vld [vmem:[#allocation5 + $0x3] sm:$0x1]
        %v263 = vmul.f32 %v223, %v257
        %v264 = vmul.f32 %v224, %v258
        %v265 = vmul.f32 %v225, %v257
        %v266 = vmul.f32 %v226, %v258
        %v267 = vmul.f32 %v227, %v257
        %v268 = vmul.f32 %v228, %v258
        %v269 = vmul.f32 %v229, %v257
        %v270 = vmul.f32 %v230, %v258
        %v275 = vlaneseq
        %v276 = vshrl.u32 %v275, 7
        %v277 = vsub.s32 0, %v276
        %v278 = vrot.slane %v259, %v277
        %v279 = vlaneseq
        %v280 = vshrl.u32 %v279, 7
        %v281 = vsub.s32 0, %v280
        %v282 = vrot.slane %v260, %v281
        %v283 = vlaneseq
        %v284 = vshrl.u32 %v283, 7
        %v285 = vsub.s32 0, %v284
        %v286 = vrot.slane %v261, %v285
        %v287 = vlaneseq
        %v288 = vshrl.u32 %v287, 7
        %v289 = vsub.s32 0, %v288
        %v290 = vrot.slane %v262, %v289
        %v295 = vmul.f32 %v263, %v278
        %v296 = vmul.f32 %v264, %v278
        %v297 = vmul.f32 %v265, %v282
        %v298 = vmul.f32 %v266, %v282
        %v299 = vmul.f32 %v267, %v286
        %v300 = vmul.f32 %v268, %v286
        %v301 = vmul.f32 %v269, %v290
        %v302 = vmul.f32 %v270, %v290
        %303 = vst.msk [vmem:[%s194] sm:$0xff] %vm205, %v295
        %304 = vst.msk [vmem:[%s194 + $0x8] sm:$0xff] %vm205, %v296
        %305 = vst.msk [vmem:[%s194 + $0x10] sm:$0xff] %vm205, %v297
        %306 = vst.msk [vmem:[%s194 + $0x18] sm:$0xff] %vm205, %v298
        %307 = vst.msk [vmem:[%s194 + $0x20] sm:$0xff] %vm205, %v299
        %308 = vst.msk [vmem:[%s194 + $0x28] sm:$0xff] %vm205, %v300
        %309 = vst.msk [vmem:[%s194 + $0x30] sm:$0xff] %vm205, %v301
        %310 = vst.msk [vmem:[%s194 + $0x38] sm:$0xff] %vm205, %v302
        %s311 = sand.u32 %s91, 1
        %s312 = scalar_lea.sflag [#allocation4], %s311
        %s313 = sand.u32 %s91, 1
        %s314 = smul.addr %s313, 64
        %s315 = scalar_lea.vmem [#allocation7], %s314
        // Predicated region
        $region37: #{tpu_custom_call.1} parent=27 // pred_check
          %p316 = pneg %p101
        $region38: #{tpu_custom_call.1} parent=27 // pred_check_branch
          %318 = sbr.rel (%p316) target = $region40
        $region39: #{tpu_custom_call.1} parent=27 // pred_region
          %s319 = smul.u32 2, %s25
          %s321 = ssub.s32 1024, 1024
          %322 = vsyncadd %s312, %s321
          %s323 = smul.addr %s24, 8
          %s324 = sadd.s32 %s319, %s323
          %s325 = smul.addr %s324, 128
          %s326 = scalar_lea.hbm %s2, %s325
          %s327 = sshll.u32 %s315, 4
          %s328 = int_to_ptr.vmem [resolvable:$true] %s327
          %333 = dma.vmem_to_hbm [thread:$0]  %s328, 1024, %s326, %s312, 128, 128, 8
        $region40: #{tpu_custom_call.1} parent=27 // pred_fallthru
          _
      $region28: #{tpu_custom_call.1} parent=5 // pred_fallthru
        _
      %p334 = scmp.le.s32.totalorder 2, %s15
      // Predicated region
      $region41: #{tpu_custom_call.1} parent=5 // pred_check
        %p335 = pneg %p334
      $region42: #{tpu_custom_call.1} parent=5 // pred_check_branch
        %337 = sbr.rel (%p335) target = $region44
      $region43: #{tpu_custom_call.1} parent=5 // pred_region
        %s338 = ssub.s32 %s15, 2
        // Predicated region
        $region45: #{tpu_custom_call.1} parent=43 // pred_check
          %p339 = pneg %p107
        $region46: #{tpu_custom_call.1} parent=43 // pred_check_branch
          %341 = sbr.rel (%p339) target = $region48
        $region47: #{tpu_custom_call.1} parent=43 // pred_region
          %s342 = sand.u32 %s92, 1
          %s343 = scalar_lea.sflag [#allocation4], %s342
          %s344 = sand.u32 %s92, 1
          %s345 = smul.addr %s344, 64
          %s346 = scalar_lea.vmem [#allocation7], %s345
          %347 = dma.done %s343, 1024
        $region48: #{tpu_custom_call.1} parent=43 // pred_fallthru
          _
      $region44: #{tpu_custom_call.1} parent=5 // pred_fallthru
        _
    $region6: #{tpu_custom_call.1} parent=1 // loop_footer
      %s19 = sadd.s32 1, %s15
    $region7: #{tpu_custom_call.1} parent=1 // loop_footer_branch
      %14 = sbr.rel target = $region3
    $region8: #{tpu_custom_call.1} parent=1 // loop_exit
      _
    %348 = vsyncpa [#allocation3], 1
    %s349 = scalar_lea.sflag [#allocation3], 1
    %350 = vsyncpa %s349, 1
    %351 = vsyncpa [#allocation6], 1
    %352 = vsyncpa [#allocation4], 1
    %s353 = scalar_lea.sflag [#allocation4], 1
    %354 = vsyncpa %s353, 1

</llo_original>
